<compile_context>
chip_gen: v5e
topology: v5e:2x2
jax: 0.10.0
libtpu: 0.0.40
codegen_flags: <defaults>
</compile_context>

<pallas_src>
import functools
import math

import jax
import jax.numpy as jnp
from jax.experimental import pallas as pl
from jax.experimental.pallas import tpu as pltpu

# ----------------------------- config ---------------------------------------
EMB_DIM = 32
NUM_HEADS = 4
HEAD_DIM = EMB_DIM // NUM_HEADS
FF_DIM = 4 * EMB_DIM          # default ff_dim = 4 * emb_dim
QKV_PAD = 128                 # 3*EMB_DIM = 96 padded up to a lane-dense 128
LN_EPS = 1e-5                 # PyTorch nn.LayerNorm default eps
# ff_drop defaults to 0.0 / eval mode -> dropout is identity.


def _layer_norm(h, g, b):
    mu = jnp.mean(h, axis=-1, keepdims=True)
    var = jnp.mean((h - mu) ** 2, axis=-1, keepdims=True)
    return (h - mu) * jax.lax.rsqrt(var + LN_EPS) * g + b


def _gelu(h):
    # TODO(synk): PyTorch nn.GELU() default is the exact erf form; the tanh
    # approximation is used because tanh lowers reliably on the TPU EUP.
    c = 0.7978845608028654  # sqrt(2/pi)
    return 0.5 * h * (1.0 + jnp.tanh(c * (h + 0.044715 * h * h * h)))


# ----------------------------- kernel ---------------------------------------
def _transformer_layer_kernel(
    x_ref,
    ln1_g_ref, ln1_b_ref,
    wqkv_ref, bqkv_ref, wog_ref, bo_ref,
    ln2_g_ref, ln2_b_ref,
    w1_ref, b1_ref, w2_ref, b2_ref,
    o_ref,
    *, batch, seq,
):
    B, S, H, D, E = batch, seq, NUM_HEADS, HEAD_DIM, EMB_DIM

    x = x_ref[...].astype(jnp.float32)                         # (B*S, E)

    # ---- 1. LayerNorm -> fused multi-head self-attention -> residual ----
    h = _layer_norm(x, ln1_g_ref[...], ln1_b_ref[...])
    # one lane-dense (B*S, E) @ (E, 128) bf16 matmul producing Q|K|V
    # (columns 96..127 are zero padding and never read).
    qkv = (jnp.dot(h.astype(jnp.bfloat16), wqkv_ref[...],
                   preferred_element_type=jnp.float32)
           + bqkv_ref[...])                                     # (B*S, QKV_PAD)

    # stack all (batch, head) groups along a leading axis: (B*H, S, D)
    def group(base):
        return jnp.stack(
            [qkv[b * S:(b + 1) * S, base + hh * D: base + (hh + 1) * D]
             for b in range(B) for hh in range(H)], axis=0)

    qg = group(0)
    kg = group(E)
    vg = group(2 * E)

    scale = 1.0 / math.sqrt(D)
    scores = jnp.einsum("gqd,gkd->gqk", qg, kg,
                        preferred_element_type=jnp.float32) * scale    # (B*H, S, S)
    scores = scores - jnp.max(scores, axis=-1, keepdims=True)
    p = jnp.exp(scores)
    p = p * pl.reciprocal(jnp.sum(p, axis=-1, keepdims=True), approx=True)
    ov = jnp.einsum("gqk,gkd->gqd", p, vg,
                    preferred_element_type=jnp.float32)                # (B*H, S, D)

    # output projection decomposed per head: attn_b = sum_h ov[b,h] @ Wo[h*D:(h+1)*D]
    proj = jnp.einsum("gqd,gde->gqe", ov.astype(jnp.bfloat16), wog_ref[...],
                      preferred_element_type=jnp.float32)              # (B*H, S, E)
    attn = jnp.concatenate(
        [jnp.sum(proj[b * H:(b + 1) * H], axis=0) for b in range(B)], axis=0)  # (B*S, E)
    x = x + attn + bo_ref[...]

    # ---- 2. LayerNorm -> feed forward (Linear, GELU, Linear) -> residual ----
    h = _layer_norm(x, ln2_g_ref[...], ln2_b_ref[...])
    h = (jnp.dot(h.astype(jnp.bfloat16), w1_ref[...],
                 preferred_element_type=jnp.float32) + b1_ref[...])    # (B*S, FF_DIM)
    h = _gelu(h)
    h = (jnp.dot(h.astype(jnp.bfloat16), w2_ref[...],
                 preferred_element_type=jnp.float32) + b2_ref[...])    # (B*S, E)
    x = x + h

    o_ref[...] = x.astype(o_ref.dtype)


# ----------------------------- wrapper ---------------------------------------
def transformer_layer(x, params):
    B, S, E = x.shape
    assert E == EMB_DIM
    (ln1_g, ln1_b, wqkv, bqkv, wo, bo, ln2_g, ln2_b, w1, b1, w2, b2) = params

    # Wrapper-side layout plumbing (free XLA work, not kernel compute):
    #  - pad the QKV projection to a lane-dense (E, 128) slab
    #  - pre-arrange Wo as per-(batch, head) (D, E) slabs: (B*H, D, E)
    wqkv_p = jnp.zeros((E, QKV_PAD), wqkv.dtype).at[:, :3 * E].set(wqkv)
    bqkv_p = jnp.zeros((1, QKV_PAD), jnp.float32).at[:, :3 * E].set(
        bqkv.astype(jnp.float32))
    wo_g = jnp.tile(wo.reshape(NUM_HEADS, HEAD_DIM, E), (B, 1, 1))

    x2 = x.reshape(B * S, E)                       # all rows in one invocation
    kernel = functools.partial(_transformer_layer_kernel, batch=B, seq=S)
    vmem = pl.BlockSpec(memory_space=pltpu.MemorySpace.VMEM)

    out = pl.pallas_call(
        kernel,
        out_shape=jax.ShapeDtypeStruct((B * S, E), x.dtype),
        in_specs=[vmem] * 13,
        out_specs=vmem,
    )(x2, ln1_g, ln1_b, wqkv_p, bqkv_p, wo_g, bo, ln2_g, ln2_b, w1, b1, w2, b2)
    return out.reshape(B, S, E)


# ----------------------------- reference (pure JAX) --------------------------
def reference_transformer_layer(x, params):
    (ln1_g, ln1_b, wqkv, bqkv, wo, bo, ln2_g, ln2_b, w1, b1, w2, b2) = params
    f = lambda t: t.astype(jnp.float32)

    def ln(h, g, b):
        mu = h.mean(-1, keepdims=True)
        var = ((h - mu) ** 2).mean(-1, keepdims=True)
        return (h - mu) / jnp.sqrt(var + LN_EPS) * g + b

    B, S, E = x.shape
    h = ln(x, f(ln1_g)[0], f(ln1_b)[0])
    qkv = h @ f(wqkv) + f(bqkv)[0]
    q, k, v = jnp.split(qkv, 3, axis=-1)
    q = q.reshape(B, S, NUM_HEADS, HEAD_DIM)
    k = k.reshape(B, S, NUM_HEADS, HEAD_DIM)
    v = v.reshape(B, S, NUM_HEADS, HEAD_DIM)
    scores = jnp.einsum("bqhd,bkhd->bhqk", q, k) / math.sqrt(HEAD_DIM)
    p = jax.nn.softmax(scores, axis=-1)
    attn = jnp.einsum("bhqk,bkhd->bqhd", p, v).reshape(B, S, E)
    x = x + attn @ f(wo) + f(bo)[0]

    h = ln(x, f(ln2_g)[0], f(ln2_b)[0])
    h = _gelu(h @ f(w1) + f(b1)[0])
    x = x + h @ f(w2) + f(b2)[0]
    return x


# ----------------------------- params ----------------------------------------
def init_params(key):
    ks = jax.random.split(key, 8)

    def w(k, shape, dtype=jnp.bfloat16):
        # matmul weights stored in bf16 (halves weight DMA bytes); biases / LN in f32
        return (0.02 * jax.random.normal(k, shape)).astype(dtype)

    ln1_g = jnp.ones((1, EMB_DIM), jnp.float32)
    ln1_b = jnp.zeros((1, EMB_DIM), jnp.float32)
    wqkv = w(ks[0], (EMB_DIM, 3 * EMB_DIM))
    bqkv = w(ks[1], (1, 3 * EMB_DIM), jnp.float32)
    wo = w(ks[2], (EMB_DIM, EMB_DIM))
    bo = w(ks[3], (1, EMB_DIM), jnp.float32)
    ln2_g = jnp.ones((1, EMB_DIM), jnp.float32)
    ln2_b = jnp.zeros((1, EMB_DIM), jnp.float32)
    w1 = w(ks[4], (EMB_DIM, FF_DIM))
    b1 = w(ks[5], (1, FF_DIM), jnp.float32)
    w2 = w(ks[6], (FF_DIM, EMB_DIM))
    b2 = w(ks[7], (1, EMB_DIM), jnp.float32)
    return (ln1_g, ln1_b, wqkv, bqkv, wo, bo, ln2_g, ln2_b, w1, b1, w2, b2)


# ----------------------------- main -------------------------------------------
if __name__ == "__main__":
    key = jax.random.PRNGKey(0)
    kx, kp = jax.random.split(key)

    B, S = 2, 8
    x = jax.random.normal(kx, (B, S, EMB_DIM), dtype=jnp.float32)
    params = init_params(kp)

    out = transformer_layer(x, params)
    out = jax.block_until_ready(out)

    ref = reference_transformer_layer(x, params)
    assert out.shape == (B, S, EMB_DIM)
    assert jnp.allclose(out, ref, rtol=2e-2, atol=2e-2), "mismatch vs pure-JAX reference"

    print("KERNEL_OK")
</pallas_src>

<mosaic_0001>
module attributes {stable_mosaic.version = 11 : i64} {
  func.func @_transformer_layer_kernel(%arg0: memref<16x32xf32, #tpu.memory_space<vmem>>, %arg1: memref<1x32xf32, #tpu.memory_space<vmem>>, %arg2: memref<1x32xf32, #tpu.memory_space<vmem>>, %arg3: memref<32x128xbf16, #tpu.memory_space<vmem>>, %arg4: memref<1x128xf32, #tpu.memory_space<vmem>>, %arg5: memref<8x8x32xbf16, #tpu.memory_space<vmem>>, %arg6: memref<1x32xf32, #tpu.memory_space<vmem>>, %arg7: memref<1x32xf32, #tpu.memory_space<vmem>>, %arg8: memref<1x32xf32, #tpu.memory_space<vmem>>, %arg9: memref<32x128xbf16, #tpu.memory_space<vmem>>, %arg10: memref<1x128xf32, #tpu.memory_space<vmem>>, %arg11: memref<128x32xbf16, #tpu.memory_space<vmem>>, %arg12: memref<1x32xf32, #tpu.memory_space<vmem>>, %arg13: memref<16x32xf32, #tpu.memory_space<vmem>>) attributes {dimension_semantics = [], scalar_prefetch = 0 : i64, scratch_operands = 0 : i64, tpu.core_type = #tpu.core_type<tc>} {
    %c0 = arith.constant 0 : index
    %c0_0 = arith.constant 0 : index
    %0 = vector.load %arg0[%c0, %c0_0] : memref<16x32xf32, #tpu.memory_space<vmem>>, vector<16x32xf32>
    %c0_1 = arith.constant 0 : index
    %c0_2 = arith.constant 0 : index
    %1 = vector.load %arg1[%c0_1, %c0_2] : memref<1x32xf32, #tpu.memory_space<vmem>>, vector<1x32xf32>
    %c0_3 = arith.constant 0 : index
    %c0_4 = arith.constant 0 : index
    %2 = vector.load %arg2[%c0_3, %c0_4] : memref<1x32xf32, #tpu.memory_space<vmem>>, vector<1x32xf32>
    %cst = arith.constant dense<0.000000e+00> : vector<16xf32>
    %3 = vector.multi_reduction <add>, %0, %cst [1] : vector<16x32xf32> to vector<16xf32>
    %4 = vector.shape_cast %3 : vector<16xf32> to vector<16x1xf32>
    %cst_5 = arith.constant 3.200000e+01 : f32
    %5 = vector.broadcast %cst_5 : f32 to vector<16x1xf32>
    %6 = arith.divf %4, %5 : vector<16x1xf32>
    %7 = vector.broadcast %6 : vector<16x1xf32> to vector<16x32xf32>
    %8 = arith.subf %0, %7 : vector<16x32xf32>
    %9 = arith.mulf %8, %8 : vector<16x32xf32>
    %cst_6 = arith.constant dense<0.000000e+00> : vector<16xf32>
    %10 = vector.multi_reduction <add>, %9, %cst_6 [1] : vector<16x32xf32> to vector<16xf32>
    %11 = vector.shape_cast %10 : vector<16xf32> to vector<16x1xf32>
    %cst_7 = arith.constant 3.200000e+01 : f32
    %12 = vector.broadcast %cst_7 : f32 to vector<16x1xf32>
    %13 = arith.divf %11, %12 : vector<16x1xf32>
    %14 = vector.broadcast %6 : vector<16x1xf32> to vector<16x32xf32>
    %15 = arith.subf %0, %14 : vector<16x32xf32>
    %cst_8 = arith.constant 9.99999974E-6 : f32
    %16 = vector.broadcast %cst_8 : f32 to vector<16x1xf32>
    %17 = arith.addf %13, %16 : vector<16x1xf32>
    %18 = math.rsqrt %17 : vector<16x1xf32>
    %19 = vector.broadcast %18 : vector<16x1xf32> to vector<16x32xf32>
    %20 = arith.mulf %15, %19 : vector<16x32xf32>
    %21 = vector.broadcast %1 : vector<1x32xf32> to vector<16x32xf32>
    %22 = arith.mulf %20, %21 : vector<16x32xf32>
    %23 = vector.broadcast %2 : vector<1x32xf32> to vector<16x32xf32>
    %24 = arith.addf %22, %23 : vector<16x32xf32>
    %25 = arith.truncf %24 : vector<16x32xf32> to vector<16x32xbf16>
    %c0_9 = arith.constant 0 : index
    %c0_10 = arith.constant 0 : index
    %26 = vector.load %arg3[%c0_9, %c0_10] : memref<32x128xbf16, #tpu.memory_space<vmem>>, vector<32x128xbf16>
    %cst_11 = arith.constant dense<0.000000e+00> : vector<16x128xf32>
    %27 = tpu.matmul %25, %26, %cst_11 {dimension_numbers = #tpu.dot_dimension_numbers<[1], [0], [0], [1], [0, 0, 1, 1], [], []>} : vector<16x32xbf16>, vector<32x128xbf16>, vector<16x128xf32> -> vector<16x128xf32>
    %c0_12 = arith.constant 0 : index
    %c0_13 = arith.constant 0 : index
    %28 = vector.load %arg4[%c0_12, %c0_13] : memref<1x128xf32, #tpu.memory_space<vmem>>, vector<1x128xf32>
    %29 = vector.broadcast %28 : vector<1x128xf32> to vector<16x128xf32>
    %30 = arith.addf %27, %29 : vector<16x128xf32>
    %31 = vector.extract_strided_slice %30 {offsets = [0, 0], sizes = [8, 8], strides = [1, 1]} : vector<16x128xf32> to vector<8x8xf32>
    %32 = vector.extract_strided_slice %30 {offsets = [0, 8], sizes = [8, 8], strides = [1, 1]} : vector<16x128xf32> to vector<8x8xf32>
    %33 = vector.extract_strided_slice %30 {offsets = [0, 16], sizes = [8, 8], strides = [1, 1]} : vector<16x128xf32> to vector<8x8xf32>
    %34 = vector.extract_strided_slice %30 {offsets = [0, 24], sizes = [8, 8], strides = [1, 1]} : vector<16x128xf32> to vector<8x8xf32>
    %35 = vector.extract_strided_slice %30 {offsets = [8, 0], sizes = [8, 8], strides = [1, 1]} : vector<16x128xf32> to vector<8x8xf32>
    %36 = vector.extract_strided_slice %30 {offsets = [8, 8], sizes = [8, 8], strides = [1, 1]} : vector<16x128xf32> to vector<8x8xf32>
    %37 = vector.extract_strided_slice %30 {offsets = [8, 16], sizes = [8, 8], strides = [1, 1]} : vector<16x128xf32> to vector<8x8xf32>
    %38 = vector.extract_strided_slice %30 {offsets = [8, 24], sizes = [8, 8], strides = [1, 1]} : vector<16x128xf32> to vector<8x8xf32>
    %39 = vector.shape_cast %31 : vector<8x8xf32> to vector<1x8x8xf32>
    %40 = vector.shape_cast %32 : vector<8x8xf32> to vector<1x8x8xf32>
    %41 = vector.shape_cast %33 : vector<8x8xf32> to vector<1x8x8xf32>
    %42 = vector.shape_cast %34 : vector<8x8xf32> to vector<1x8x8xf32>
    %43 = vector.shape_cast %35 : vector<8x8xf32> to vector<1x8x8xf32>
    %44 = vector.shape_cast %36 : vector<8x8xf32> to vector<1x8x8xf32>
    %45 = vector.shape_cast %37 : vector<8x8xf32> to vector<1x8x8xf32>
    %46 = vector.shape_cast %38 : vector<8x8xf32> to vector<1x8x8xf32>
    %47 = tpu.concatenate %39, %40, %41, %42, %43, %44, %45, %46 in 0 : vector<1x8x8xf32>, vector<1x8x8xf32>, vector<1x8x8xf32>, vector<1x8x8xf32>, vector<1x8x8xf32>, vector<1x8x8xf32>, vector<1x8x8xf32>, vector<1x8x8xf32> -> vector<8x8x8xf32>
    %48 = vector.extract_strided_slice %30 {offsets = [0, 32], sizes = [8, 8], strides = [1, 1]} : vector<16x128xf32> to vector<8x8xf32>
    %49 = vector.extract_strided_slice %30 {offsets = [0, 40], sizes = [8, 8], strides = [1, 1]} : vector<16x128xf32> to vector<8x8xf32>
    %50 = vector.extract_strided_slice %30 {offsets = [0, 48], sizes = [8, 8], strides = [1, 1]} : vector<16x128xf32> to vector<8x8xf32>
    %51 = vector.extract_strided_slice %30 {offsets = [0, 56], sizes = [8, 8], strides = [1, 1]} : vector<16x128xf32> to vector<8x8xf32>
    %52 = vector.extract_strided_slice %30 {offsets = [8, 32], sizes = [8, 8], strides = [1, 1]} : vector<16x128xf32> to vector<8x8xf32>
    %53 = vector.extract_strided_slice %30 {offsets = [8, 40], sizes = [8, 8], strides = [1, 1]} : vector<16x128xf32> to vector<8x8xf32>
    %54 = vector.extract_strided_slice %30 {offsets = [8, 48], sizes = [8, 8], strides = [1, 1]} : vector<16x128xf32> to vector<8x8xf32>
    %55 = vector.extract_strided_slice %30 {offsets = [8, 56], sizes = [8, 8], strides = [1, 1]} : vector<16x128xf32> to vector<8x8xf32>
    %56 = vector.shape_cast %48 : vector<8x8xf32> to vector<1x8x8xf32>
    %57 = vector.shape_cast %49 : vector<8x8xf32> to vector<1x8x8xf32>
    %58 = vector.shape_cast %50 : vector<8x8xf32> to vector<1x8x8xf32>
    %59 = vector.shape_cast %51 : vector<8x8xf32> to vector<1x8x8xf32>
    %60 = vector.shape_cast %52 : vector<8x8xf32> to vector<1x8x8xf32>
    %61 = vector.shape_cast %53 : vector<8x8xf32> to vector<1x8x8xf32>
    %62 = vector.shape_cast %54 : vector<8x8xf32> to vector<1x8x8xf32>
    %63 = vector.shape_cast %55 : vector<8x8xf32> to vector<1x8x8xf32>
    %64 = tpu.concatenate %56, %57, %58, %59, %60, %61, %62, %63 in 0 : vector<1x8x8xf32>, vector<1x8x8xf32>, vector<1x8x8xf32>, vector<1x8x8xf32>, vector<1x8x8xf32>, vector<1x8x8xf32>, vector<1x8x8xf32>, vector<1x8x8xf32> -> vector<8x8x8xf32>
    %65 = vector.extract_strided_slice %30 {offsets = [0, 64], sizes = [8, 8], strides = [1, 1]} : vector<16x128xf32> to vector<8x8xf32>
    %66 = vector.extract_strided_slice %30 {offsets = [0, 72], sizes = [8, 8], strides = [1, 1]} : vector<16x128xf32> to vector<8x8xf32>
    %67 = vector.extract_strided_slice %30 {offsets = [0, 80], sizes = [8, 8], strides = [1, 1]} : vector<16x128xf32> to vector<8x8xf32>
    %68 = vector.extract_strided_slice %30 {offsets = [0, 88], sizes = [8, 8], strides = [1, 1]} : vector<16x128xf32> to vector<8x8xf32>
    %69 = vector.extract_strided_slice %30 {offsets = [8, 64], sizes = [8, 8], strides = [1, 1]} : vector<16x128xf32> to vector<8x8xf32>
    %70 = vector.extract_strided_slice %30 {offsets = [8, 72], sizes = [8, 8], strides = [1, 1]} : vector<16x128xf32> to vector<8x8xf32>
    %71 = vector.extract_strided_slice %30 {offsets = [8, 80], sizes = [8, 8], strides = [1, 1]} : vector<16x128xf32> to vector<8x8xf32>
    %72 = vector.extract_strided_slice %30 {offsets = [8, 88], sizes = [8, 8], strides = [1, 1]} : vector<16x128xf32> to vector<8x8xf32>
    %73 = vector.shape_cast %65 : vector<8x8xf32> to vector<1x8x8xf32>
    %74 = vector.shape_cast %66 : vector<8x8xf32> to vector<1x8x8xf32>
    %75 = vector.shape_cast %67 : vector<8x8xf32> to vector<1x8x8xf32>
    %76 = vector.shape_cast %68 : vector<8x8xf32> to vector<1x8x8xf32>
    %77 = vector.shape_cast %69 : vector<8x8xf32> to vector<1x8x8xf32>
    %78 = vector.shape_cast %70 : vector<8x8xf32> to vector<1x8x8xf32>
    %79 = vector.shape_cast %71 : vector<8x8xf32> to vector<1x8x8xf32>
    %80 = vector.shape_cast %72 : vector<8x8xf32> to vector<1x8x8xf32>
    %81 = tpu.concatenate %73, %74, %75, %76, %77, %78, %79, %80 in 0 : vector<1x8x8xf32>, vector<1x8x8xf32>, vector<1x8x8xf32>, vector<1x8x8xf32>, vector<1x8x8xf32>, vector<1x8x8xf32>, vector<1x8x8xf32>, vector<1x8x8xf32> -> vector<8x8x8xf32>
    "tpu.trace_start"() <{level = 10 : i32, message = "gqd,gkd->gqk"}> : () -> ()
    %cst_14 = arith.constant dense<0.000000e+00> : vector<8x8x8xf32>
    %82 = tpu.matmul %47, %64, %cst_14 {dimension_numbers = #tpu.dot_dimension_numbers<[2], [2], [1], [1], [0, 0, 0, 1, 1, 1], [0], [0]>} : vector<8x8x8xf32>, vector<8x8x8xf32>, vector<8x8x8xf32> -> vector<8x8x8xf32>
    "tpu.trace_stop"() : () -> ()
    %cst_15 = arith.constant 0.353553385 : f32
    %83 = vector.broadcast %cst_15 : f32 to vector<8x8x8xf32>
    %84 = arith.mulf %82, %83 : vector<8x8x8xf32>
    %cst_16 = arith.constant dense<0xFF800000> : vector<8x8xf32>
    %85 = vector.multi_reduction <maximumf>, %84, %cst_16 [2] : vector<8x8x8xf32> to vector<8x8xf32>
    %86 = vector.shape_cast %85 : vector<8x8xf32> to vector<8x8x1xf32>
    %87 = vector.broadcast %86 : vector<8x8x1xf32> to vector<8x8x8xf32>
    %88 = arith.subf %84, %87 : vector<8x8x8xf32>
    %89 = math.exp %88 : vector<8x8x8xf32>
    %cst_17 = arith.constant dense<0.000000e+00> : vector<8x8xf32>
    %90 = vector.multi_reduction <add>, %89, %cst_17 [2] : vector<8x8x8xf32> to vector<8x8xf32>
    %91 = vector.shape_cast %90 : vector<8x8xf32> to vector<8x8x1xf32>
    %92 = tpu.reciprocal %91 {approx = true} : vector<8x8x1xf32> -> vector<8x8x1xf32>
    %93 = vector.broadcast %92 : vector<8x8x1xf32> to vector<8x8x8xf32>
    %94 = arith.mulf %89, %93 : vector<8x8x8xf32>
    "tpu.trace_start"() <{level = 10 : i32, message = "gqk,gkd->gqd"}> : () -> ()
    %cst_18 = arith.constant dense<0.000000e+00> : vector<8x8x8xf32>
    %95 = tpu.matmul %94, %81, %cst_18 {dimension_numbers = #tpu.dot_dimension_numbers<[2], [1], [1], [2], [0, 0, 0, 1, 1, 2], [0], [0]>} : vector<8x8x8xf32>, vector<8x8x8xf32>, vector<8x8x8xf32> -> vector<8x8x8xf32>
    "tpu.trace_stop"() : () -> ()
    %96 = arith.truncf %95 : vector<8x8x8xf32> to vector<8x8x8xbf16>
    %c0_19 = arith.constant 0 : index
    %c0_20 = arith.constant 0 : index
    %c0_21 = arith.constant 0 : index
    %97 = vector.load %arg5[%c0_19, %c0_20, %c0_21] : memref<8x8x32xbf16, #tpu.memory_space<vmem>>, vector<8x8x32xbf16>
    "tpu.trace_start"() <{level = 10 : i32, message = "gqd,gde->gqe"}> : () -> ()
    %cst_22 = arith.constant dense<0.000000e+00> : vector<8x8x32xf32>
    %98 = tpu.matmul %96, %97, %cst_22 {dimension_numbers = #tpu.dot_dimension_numbers<[2], [1], [1], [2], [0, 0, 0, 1, 1, 2], [0], [0]>} : vector<8x8x8xbf16>, vector<8x8x32xbf16>, vector<8x8x32xf32> -> vector<8x8x32xf32>
    "tpu.trace_stop"() : () -> ()
    %99 = vector.extract_strided_slice %98 {offsets = [0, 0, 0], sizes = [4, 8, 32], strides = [1, 1, 1]} : vector<8x8x32xf32> to vector<4x8x32xf32>
    %cst_23 = arith.constant dense<0.000000e+00> : vector<8x32xf32>
    %100 = vector.multi_reduction <add>, %99, %cst_23 [0] : vector<4x8x32xf32> to vector<8x32xf32>
    %101 = vector.extract_strided_slice %98 {offsets = [4, 0, 0], sizes = [4, 8, 32], strides = [1, 1, 1]} : vector<8x8x32xf32> to vector<4x8x32xf32>
    %cst_24 = arith.constant dense<0.000000e+00> : vector<8x32xf32>
    %102 = vector.multi_reduction <add>, %101, %cst_24 [0] : vector<4x8x32xf32> to vector<8x32xf32>
    %103 = tpu.concatenate %100, %102 in 0 : vector<8x32xf32>, vector<8x32xf32> -> vector<16x32xf32>
    %104 = arith.addf %0, %103 : vector<16x32xf32>
    %c0_25 = arith.constant 0 : index
    %c0_26 = arith.constant 0 : index
    %105 = vector.load %arg6[%c0_25, %c0_26] : memref<1x32xf32, #tpu.memory_space<vmem>>, vector<1x32xf32>
    %106 = vector.broadcast %105 : vector<1x32xf32> to vector<16x32xf32>
    %107 = arith.addf %104, %106 : vector<16x32xf32>
    %c0_27 = arith.constant 0 : index
    %c0_28 = arith.constant 0 : index
    %108 = vector.load %arg7[%c0_27, %c0_28] : memref<1x32xf32, #tpu.memory_space<vmem>>, vector<1x32xf32>
    %c0_29 = arith.constant 0 : index
    %c0_30 = arith.constant 0 : index
    %109 = vector.load %arg8[%c0_29, %c0_30] : memref<1x32xf32, #tpu.memory_space<vmem>>, vector<1x32xf32>
    %cst_31 = arith.constant dense<0.000000e+00> : vector<16xf32>
    %110 = vector.multi_reduction <add>, %107, %cst_31 [1] : vector<16x32xf32> to vector<16xf32>
    %111 = vector.shape_cast %110 : vector<16xf32> to vector<16x1xf32>
    %cst_32 = arith.constant 3.200000e+01 : f32
    %112 = vector.broadcast %cst_32 : f32 to vector<16x1xf32>
    %113 = arith.divf %111, %112 : vector<16x1xf32>
    %114 = vector.broadcast %113 : vector<16x1xf32> to vector<16x32xf32>
    %115 = arith.subf %107, %114 : vector<16x32xf32>
    %116 = arith.mulf %115, %115 : vector<16x32xf32>
    %cst_33 = arith.constant dense<0.000000e+00> : vector<16xf32>
    %117 = vector.multi_reduction <add>, %116, %cst_33 [1] : vector<16x32xf32> to vector<16xf32>
    %118 = vector.shape_cast %117 : vector<16xf32> to vector<16x1xf32>
    %cst_34 = arith.constant 3.200000e+01 : f32
    %119 = vector.broadcast %cst_34 : f32 to vector<16x1xf32>
    %120 = arith.divf %118, %119 : vector<16x1xf32>
    %121 = vector.broadcast %113 : vector<16x1xf32> to vector<16x32xf32>
    %122 = arith.subf %107, %121 : vector<16x32xf32>
    %cst_35 = arith.constant 9.99999974E-6 : f32
    %123 = vector.broadcast %cst_35 : f32 to vector<16x1xf32>
    %124 = arith.addf %120, %123 : vector<16x1xf32>
    %125 = math.rsqrt %124 : vector<16x1xf32>
    %126 = vector.broadcast %125 : vector<16x1xf32> to vector<16x32xf32>
    %127 = arith.mulf %122, %126 : vector<16x32xf32>
    %128 = vector.broadcast %108 : vector<1x32xf32> to vector<16x32xf32>
    %129 = arith.mulf %127, %128 : vector<16x32xf32>
    %130 = vector.broadcast %109 : vector<1x32xf32> to vector<16x32xf32>
    %131 = arith.addf %129, %130 : vector<16x32xf32>
    %132 = arith.truncf %131 : vector<16x32xf32> to vector<16x32xbf16>
    %c0_36 = arith.constant 0 : index
    %c0_37 = arith.constant 0 : index
    %133 = vector.load %arg9[%c0_36, %c0_37] : memref<32x128xbf16, #tpu.memory_space<vmem>>, vector<32x128xbf16>
    %cst_38 = arith.constant dense<0.000000e+00> : vector<16x128xf32>
    %134 = tpu.matmul %132, %133, %cst_38 {dimension_numbers = #tpu.dot_dimension_numbers<[1], [0], [0], [1], [0, 0, 1, 1], [], []>} : vector<16x32xbf16>, vector<32x128xbf16>, vector<16x128xf32> -> vector<16x128xf32>
    %c0_39 = arith.constant 0 : index
    %c0_40 = arith.constant 0 : index
    %135 = vector.load %arg10[%c0_39, %c0_40] : memref<1x128xf32, #tpu.memory_space<vmem>>, vector<1x128xf32>
    %136 = vector.broadcast %135 : vector<1x128xf32> to vector<16x128xf32>
    %137 = arith.addf %134, %136 : vector<16x128xf32>
    %cst_41 = arith.constant 5.000000e-01 : f32
    %138 = vector.broadcast %cst_41 : f32 to vector<16x128xf32>
    %139 = arith.mulf %138, %137 : vector<16x128xf32>
    %cst_42 = arith.constant 4.471500e-02 : f32
    %140 = vector.broadcast %cst_42 : f32 to vector<16x128xf32>
    %141 = arith.mulf %140, %137 : vector<16x128xf32>
    %142 = arith.mulf %141, %137 : vector<16x128xf32>
    %143 = arith.mulf %142, %137 : vector<16x128xf32>
    %144 = arith.addf %137, %143 : vector<16x128xf32>
    %cst_43 = arith.constant 0.797884583 : f32
    %145 = vector.broadcast %cst_43 : f32 to vector<16x128xf32>
    %146 = arith.mulf %145, %144 : vector<16x128xf32>
    %147 = math.tanh %146 : vector<16x128xf32>
    %cst_44 = arith.constant 1.000000e+00 : f32
    %148 = vector.broadcast %cst_44 : f32 to vector<16x128xf32>
    %149 = arith.addf %148, %147 : vector<16x128xf32>
    %150 = arith.mulf %139, %149 : vector<16x128xf32>
    %151 = arith.truncf %150 : vector<16x128xf32> to vector<16x128xbf16>
    %c0_45 = arith.constant 0 : index
    %c0_46 = arith.constant 0 : index
    %152 = vector.load %arg11[%c0_45, %c0_46] : memref<128x32xbf16, #tpu.memory_space<vmem>>, vector<128x32xbf16>
    %cst_47 = arith.constant dense<0.000000e+00> : vector<16x32xf32>
    %153 = tpu.matmul %151, %152, %cst_47 {dimension_numbers = #tpu.dot_dimension_numbers<[1], [0], [0], [1], [0, 0, 1, 1], [], []>} : vector<16x128xbf16>, vector<128x32xbf16>, vector<16x32xf32> -> vector<16x32xf32>
    %c0_48 = arith.constant 0 : index
    %c0_49 = arith.constant 0 : index
    %154 = vector.load %arg12[%c0_48, %c0_49] : memref<1x32xf32, #tpu.memory_space<vmem>>, vector<1x32xf32>
    %155 = vector.broadcast %154 : vector<1x32xf32> to vector<16x32xf32>
    %156 = arith.addf %153, %155 : vector<16x32xf32>
    %157 = arith.addf %107, %156 : vector<16x32xf32>
    %c0_50 = arith.constant 0 : index
    %c0_51 = arith.constant 0 : index
    %158 = vector.load %arg13[%c0_50, %c0_51] : memref<16x32xf32, #tpu.memory_space<vmem>>, vector<16x32xf32>
    tpu.vector_store %arg13[%c0_50, %c0_51], %157 {strides = array<i32>} : memref<16x32xf32, #tpu.memory_space<vmem>>, vector<16x32xf32>,
    return
  }
}

</mosaic_0001>

<llo_original>
// kernel: tpu_custom_call.1
$region0: #{tpu_custom_call.1}
  #allocation0 [shape = 'u32[]', space=smem, size = 0x4, offset = 0x4, fixed_abs, tag = 'smem constant byte address 0x4 - core index']
  #allocation1 [shape = 'u32[72,128]{1,0:T(1,128)}', space=vmem, size = 0x9000, scoped, tag = 'internal scratch']
  %s0 = inlined_call_operand.vmem [shape: f32[16,32], index: 0, kind: input, shape index: {}]
  %s1 = inlined_call_operand.hbm [shape: f32[1,32], index: 1, kind: input, shape index: {}]
  %s2 = inlined_call_operand.vmem [shape: f32[1,32], index: 2, kind: input, shape index: {}]
  %s3 = inlined_call_operand.vmem [shape: bf16[32,128], index: 3, kind: input, shape index: {}]
  %s4 = inlined_call_operand.vmem [shape: f32[1,128], index: 4, kind: input, shape index: {}]
  %s5 = inlined_call_operand.vmem [shape: bf16[8,8,32], index: 5, kind: input, shape index: {}]
  %s6 = inlined_call_operand.vmem [shape: f32[1,32], index: 6, kind: input, shape index: {}]
  %s7 = inlined_call_operand.vmem [shape: f32[1,32], index: 7, kind: input, shape index: {}]
  %s8 = inlined_call_operand.vmem [shape: f32[1,32], index: 8, kind: input, shape index: {}]
  %s9 = inlined_call_operand.vmem [shape: bf16[32,128], index: 9, kind: input, shape index: {}]
  %s10 = inlined_call_operand.vmem [shape: f32[1,128], index: 10, kind: input, shape index: {}]
  %s11 = inlined_call_operand.vmem [shape: bf16[128,32], index: 11, kind: input, shape index: {}]
  %s12 = inlined_call_operand.vmem [shape: f32[1,32], index: 12, kind: input, shape index: {}]
  %s13 = inlined_call_operand.hbm [shape: f32[16,32], index: 13, kind: output, shape index: {}]
  %s14 = sld [smem:[#allocation0]]
  $region66: #{tpu_custom_call.1} parent=0
    _
  %s16 = ssub.s32 1, %s14
  %s17 = scalar_select 0, %s16, %s14
  $region1: #{tpu_custom_call.1} parent=0
    #allocation2 [shape = 'u8[512]{0}', space=vmem, size = 0x400, scoped, tag = 'input window, operand 1, single buffered']
    #allocation3 [shape = 's32[1]{0}', space=sflag, size = 0x4, scoped, tag = 'scoped memory for tpu_custom_call.1']
    #allocation4 [shape = 's32[1]{0}', space=sflag, size = 0x4, scoped, tag = 'scoped memory for tpu_custom_call.1']
    #allocation5 [shape = 'u8[8192]{0}', space=vmem, size = 0x2000, scoped, tag = 'output window, operand 0, single buffered']
    %18 = vsyncpa [#allocation3], 0
    %19 = vsyncpa [#allocation4], 0
    // Predicated region
    $region2: #{tpu_custom_call.1} parent=1 // pred_check
      _
    $region3: #{tpu_custom_call.1} parent=1 // pred_check_branch
      %21 = sbr.rel (0) target = $region5
    $region4: #{tpu_custom_call.1} parent=1 // pred_region
      _
    $region5: #{tpu_custom_call.1} parent=1 // pred_fallthru
      _
    // Predicated region
    $region6: #{tpu_custom_call.1} parent=1 // pred_check
      _
    $region7: #{tpu_custom_call.1} parent=1 // pred_check_branch
      %23 = sbr.rel (0) target = $region9
    $region8: #{tpu_custom_call.1} parent=1 // pred_region
      %25 = vsyncadd [#allocation3], 0
      %s27 = sshll.u32 %s1, 4
      %s28 = int_to_ptr.hbm [resolvable:$true] %s27
      %s29 = sshll.u32 [#allocation2], 4
      %s30 = int_to_ptr.vmem [resolvable:$true] %s29
      %32 = dma.hbm_to_vmem [thread:$0]  %s28, 16, %s30, [#allocation3]
    $region9: #{tpu_custom_call.1} parent=1 // pred_fallthru
      _
    // Predicated region
    $region10: #{tpu_custom_call.1} parent=1 // pred_check
      _
    $region11: #{tpu_custom_call.1} parent=1 // pred_check_branch
      %34 = sbr.rel (0) target = $region13
    $region12: #{tpu_custom_call.1} parent=1 // pred_region
      _
    $region13: #{tpu_custom_call.1} parent=1 // pred_fallthru
      _
    // Predicated region
    $region14: #{tpu_custom_call.1} parent=1 // pred_check
      _
    $region15: #{tpu_custom_call.1} parent=1 // pred_check_branch
      %36 = sbr.rel (0) target = $region17
    $region16: #{tpu_custom_call.1} parent=1 // pred_region
      _
    $region17: #{tpu_custom_call.1} parent=1 // pred_fallthru
      _
    // Predicated region
    $region18: #{tpu_custom_call.1} parent=1 // pred_check
      _
    $region19: #{tpu_custom_call.1} parent=1 // pred_check_branch
      %38 = sbr.rel (0) target = $region21
    $region20: #{tpu_custom_call.1} parent=1 // pred_region
      _
    $region21: #{tpu_custom_call.1} parent=1 // pred_fallthru
      _
    // Predicated region
    $region22: #{tpu_custom_call.1} parent=1 // pred_check
      _
    $region23: #{tpu_custom_call.1} parent=1 // pred_check_branch
      %40 = sbr.rel (0) target = $region25
    $region24: #{tpu_custom_call.1} parent=1 // pred_region
      _
    $region25: #{tpu_custom_call.1} parent=1 // pred_fallthru
      _
    // Predicated region
    $region26: #{tpu_custom_call.1} parent=1 // pred_check
      _
    $region27: #{tpu_custom_call.1} parent=1 // pred_check_branch
      %42 = sbr.rel (0) target = $region29
    $region28: #{tpu_custom_call.1} parent=1 // pred_region
      _
    $region29: #{tpu_custom_call.1} parent=1 // pred_fallthru
      _
    // Predicated region
    $region30: #{tpu_custom_call.1} parent=1 // pred_check
      _
    $region31: #{tpu_custom_call.1} parent=1 // pred_check_branch
      %44 = sbr.rel (0) target = $region33
    $region32: #{tpu_custom_call.1} parent=1 // pred_region
      _
    $region33: #{tpu_custom_call.1} parent=1 // pred_fallthru
      _
    // Predicated region
    $region34: #{tpu_custom_call.1} parent=1 // pred_check
      _
    $region35: #{tpu_custom_call.1} parent=1 // pred_check_branch
      %46 = sbr.rel (0) target = $region37
    $region36: #{tpu_custom_call.1} parent=1 // pred_region
      _
    $region37: #{tpu_custom_call.1} parent=1 // pred_fallthru
      _
    // Predicated region
    $region38: #{tpu_custom_call.1} parent=1 // pred_check
      _
    $region39: #{tpu_custom_call.1} parent=1 // pred_check_branch
      %48 = sbr.rel (0) target = $region41
    $region40: #{tpu_custom_call.1} parent=1 // pred_region
      _
    $region41: #{tpu_custom_call.1} parent=1 // pred_fallthru
      _
    // Predicated region
    $region42: #{tpu_custom_call.1} parent=1 // pred_check
      _
    $region43: #{tpu_custom_call.1} parent=1 // pred_check_branch
      %50 = sbr.rel (0) target = $region45
    $region44: #{tpu_custom_call.1} parent=1 // pred_region
      _
    $region45: #{tpu_custom_call.1} parent=1 // pred_fallthru
      _
    // Predicated region
    $region46: #{tpu_custom_call.1} parent=1 // pred_check
      _
    $region47: #{tpu_custom_call.1} parent=1 // pred_check_branch
      %52 = sbr.rel (0) target = $region49
    $region48: #{tpu_custom_call.1} parent=1 // pred_region
      _
    $region49: #{tpu_custom_call.1} parent=1 // pred_fallthru
      _
    // Predicated region
    $region50: #{tpu_custom_call.1} parent=1 // pred_check
      _
    $region51: #{tpu_custom_call.1} parent=1 // pred_check_branch
      %54 = sbr.rel (0) target = $region53
    $region52: #{tpu_custom_call.1} parent=1 // pred_region
      _
    $region53: #{tpu_custom_call.1} parent=1 // pred_fallthru
      _
    // Predicated region
    $region54: #{tpu_custom_call.1} parent=1 // pred_check
      _
    $region55: #{tpu_custom_call.1} parent=1 // pred_check_branch
      %56 = sbr.rel (0) target = $region57
    $region56: #{tpu_custom_call.1} parent=1 // pred_region
      %58 = dma.done [#allocation3], 16
    $region57: #{tpu_custom_call.1} parent=1 // pred_fallthru
      _
    %v60 = vld [vmem:[%s0] sm:$0xff]
    %v61 = vld [vmem:[%s0 + $0x8] sm:$0xff]
    %v62 = vld [vmem:[#allocation2] sm:$0x1]
    %v63 = vld [vmem:[%s2] sm:$0x1]
    %vm64 = vcmask 261120
    %v65 = vsel %vm64, %v60, 0.0
    %66 = vadd.xlane.f32.xlu0 %v65
    %v67 = vpop.xlane.xlu0 %66
    %v68 = vsel %vm64, %v61, 0.0
    %69 = vadd.xlane.f32.xlu0 %v68
    %v70 = vpop.xlane.xlu0 %69
    %v71 = vrcp.pop 32.0
    %v72 = vmul.f32 32.0, %v71
    %v73 = vsub.f32 1.0, %v72
    %v74 = vmul.f32 %v71, %v73
    %v75 = vadd.f32 %v71, %v74
    %vm76 = vweird.f32 %v71
    %v77 = vsel %vm76, %v71, %v75
    %v78 = vmul.f32 %v67, %v77
    %v79 = vmul.f32 %v70, %v77
    %v80 = vsub.f32 %v60, %v78
    %v81 = vsub.f32 %v61, %v79
    %v82 = vmul.f32 %v80, %v80
    %v83 = vmul.f32 %v81, %v81
    %v84 = vsel %vm64, %v82, 0.0
    %85 = vadd.xlane.f32.xlu0 %v84
    %v86 = vpop.xlane.xlu0 %85
    %v87 = vsel %vm64, %v83, 0.0
    %88 = vadd.xlane.f32.xlu0 %v87
    %v89 = vpop.xlane.xlu0 %88
    %v90 = vmul.f32 %v86, %v77
    %v91 = vmul.f32 %v89, %v77
    %v92 = vadd.f32 %v90, 1e-05
    %v93 = vadd.f32 %v91, 1e-05
    %v94 = vrsqrt.pop %v92
    %v95 = vmul.f32 %v94, %v92
    %v96 = vmul.f32 %v95, %v94
    %v97 = vmul.f32 0.5, %v96
    %v98 = vsub.f32 1.5, %v97
    %v99 = vmul.f32 %v94, %v98
    %vm100 = vweird.f32 %v92
    %vm101 = vweird.f32 %v94
    %vm102 = vmor %vm100, %vm101
    %v103 = vsel %vm102, %v94, %v99
    %v104 = vrsqrt.pop %v93
    %v105 = vmul.f32 %v104, %v93
    %v106 = vmul.f32 %v105, %v104
    %v107 = vmul.f32 0.5, %v106
    %v108 = vsub.f32 1.5, %v107
    %v109 = vmul.f32 %v104, %v108
    %vm110 = vweird.f32 %v93
    %vm111 = vweird.f32 %v104
    %vm112 = vmor %vm110, %vm111
    %v113 = vsel %vm112, %v104, %v109
    %v114 = vmul.f32 %v80, %v103
    %v115 = vmul.f32 %v81, %v113
    %v117 = vperm.slane %v62, 0
    %v119 = vmul.f32 %v114, %v117
    %v120 = vmul.f32 %v115, %v117
    %v122 = vperm.slane %v63, 0
    %v124 = vadd.f32 %v119, %v122
    %v125 = vadd.f32 %v120, %v122
    %v126 = vpack.c.bf16 %v125, %v124
    %v127 = vld [vmem:[%s3] sm:$0xf]
    %v128 = vld [vmem:[%s3 + $0x4] sm:$0xf]
    %v129 = vld [vmem:[%s3 + $0x8] sm:$0xf]
    %v130 = vld [vmem:[%s3 + $0xc] sm:$0xf]
    %v131 = vld [vmem:[%s4] sm:$0x1]
    %v133 = vperm.slane %v131, 0
    %v139 = vunpack.c.l.b16 %v127
    %v140 = vunpack.c.l.b16 %v128
    %v141 = vunpack.c.l.b16 %v129
    %v142 = vunpack.c.l.b16 %v130
    %v143 = vpack.c.b16 %v140, %v139
    %v144 = vpack.c.b16 %v142, %v141
    %v148 = vsel %vm64, %v126, 0
    %150 = vmatpush.bf16.msra.mxu0 0
    %151 = vmatpush.bf16.msra.mxu0 0
    %152 = vmatpush.bf16.msra.mxu0 0
    %153 = vmatpush.bf16.msra.mxu0 0
    %154 = vmatpush.bf16.msra.mxu0 0
    %155 = vmatpush.bf16.msra.mxu0 0
    %156 = vmatpush.bf16.msra.mxu0 %v144
    %157 = vmatpush.bf16.msra.mxu0 %v143
    %158 = vmatmul.bf16.gmra.mxu0 %v148
    %v159 = vpop.f32.mrf.mxu0
    %v160 = vadd.f32 %v133, %v159
    %v161 = vpop.f32.mrf.mxu0
    %v162 = vadd.f32 %v133, %v161
    %163 = vdwg.mxu0
    %165 = vrot.lane.b32.xlu0 %v160, 120
    %v166 = vpop.permute.xlu0 %165
    %167 = vrot.lane.b32.xlu0 %v160, 112
    %v168 = vpop.permute.xlu0 %167
    %169 = vrot.lane.b32.xlu0 %v160, 104
    %v170 = vpop.permute.xlu0 %169
    %172 = vrot.lane.b32.xlu0 %v162, 120
    %v173 = vpop.permute.xlu0 %172
    %174 = vrot.lane.b32.xlu0 %v162, 112
    %v175 = vpop.permute.xlu0 %174
    %176 = vrot.lane.b32.xlu0 %v162, 104
    %v177 = vpop.permute.xlu0 %176
    %178 = vrot.lane.b32.xlu0 %v160, 96
    %v179 = vpop.permute.xlu0 %178
    %vm180 = vcmask 64512
    %v181 = vsel %vm180, %v160, 0
    %v183 = vsel %vm180, %v179, 0
    %185 = vmatpush.xpose.msra.mxu0 0.0
    %186 = vmatpush.xpose.msra.mxu0 0.0
    %187 = vmatpush.xpose.msra.mxu0 0.0
    %188 = vmatpush.xpose.msra.mxu0 0.0
    %189 = vmatpush.xpose.msra.mxu0 0.0
    %190 = vmatpush.xpose.msra.mxu0 0.0
    %191 = vmatpush.xpose.msra.mxu0 0.0
    %192 = vmatpush.xpose.msra.mxu0 0.0
    %193 = vmatpush.xpose.msra.mxu0 0.0
    %194 = vmatpush.xpose.msra.mxu0 0.0
    %195 = vmatpush.xpose.msra.mxu0 0.0
    %196 = vmatpush.xpose.msra.mxu0 0.0
    %197 = vmatpush.xpose.msra.mxu0 0.0
    %198 = vmatpush.xpose.msra.mxu0 0.0
    %199 = vmatpush.xpose.msra.mxu0 0.0
    %200 = vmatpush.xpose.msra.mxu0 %v183
    %201 = vmatmul.f32.gmra.mxu0 %v181
    %v202 = vpop.f32.mrf.mxu0
    %v203 = vadd.f32 0.0, %v202
    %204 = vdwg.mxu0
    %205 = vrot.lane.b32.xlu0 %v166, 96
    %v206 = vpop.permute.xlu0 %205
    %v207 = vsel %vm180, %v166, 0
    %v209 = vsel %vm180, %v206, 0
    %211 = vmatpush.xpose.msra.mxu0 0.0
    %212 = vmatpush.xpose.msra.mxu0 0.0
    %213 = vmatpush.xpose.msra.mxu0 0.0
    %214 = vmatpush.xpose.msra.mxu0 0.0
    %215 = vmatpush.xpose.msra.mxu0 0.0
    %216 = vmatpush.xpose.msra.mxu0 0.0
    %217 = vmatpush.xpose.msra.mxu0 0.0
    %218 = vmatpush.xpose.msra.mxu0 0.0
    %219 = vmatpush.xpose.msra.mxu0 0.0
    %220 = vmatpush.xpose.msra.mxu0 0.0
    %221 = vmatpush.xpose.msra.mxu0 0.0
    %222 = vmatpush.xpose.msra.mxu0 0.0
    %223 = vmatpush.xpose.msra.mxu0 0.0
    %224 = vmatpush.xpose.msra.mxu0 0.0
    %225 = vmatpush.xpose.msra.mxu0 0.0
    %226 = vmatpush.xpose.msra.mxu0 %v209
    %227 = vmatmul.f32.gmra.mxu0 %v207
    %v228 = vpop.f32.mrf.mxu0
    %v229 = vadd.f32 0.0, %v228
    %230 = vdwg.mxu0
    %231 = vrot.lane.b32.xlu0 %v168, 96
    %v232 = vpop.permute.xlu0 %231
    %v233 = vsel %vm180, %v168, 0
    %v235 = vsel %vm180, %v232, 0
    %237 = vmatpush.xpose.msra.mxu0 0.0
    %238 = vmatpush.xpose.msra.mxu0 0.0
    %239 = vmatpush.xpose.msra.mxu0 0.0
    %240 = vmatpush.xpose.msra.mxu0 0.0
    %241 = vmatpush.xpose.msra.mxu0 0.0
    %242 = vmatpush.xpose.msra.mxu0 0.0
    %243 = vmatpush.xpose.msra.mxu0 0.0
    %244 = vmatpush.xpose.msra.mxu0 0.0
    %245 = vmatpush.xpose.msra.mxu0 0.0
    %246 = vmatpush.xpose.msra.mxu0 0.0
    %247 = vmatpush.xpose.msra.mxu0 0.0
    %248 = vmatpush.xpose.msra.mxu0 0.0
    %249 = vmatpush.xpose.msra.mxu0 0.0
    %250 = vmatpush.xpose.msra.mxu0 0.0
    %251 = vmatpush.xpose.msra.mxu0 0.0
    %252 = vmatpush.xpose.msra.mxu0 %v235
    %253 = vmatmul.f32.gmra.mxu0 %v233
    %v254 = vpop.f32.mrf.mxu0
    %v255 = vadd.f32 0.0, %v254
    %256 = vdwg.mxu0
    %257 = vrot.lane.b32.xlu0 %v170, 96
    %v258 = vpop.permute.xlu0 %257
    %v259 = vsel %vm180, %v170, 0
    %v261 = vsel %vm180, %v258, 0
    %263 = vmatpush.xpose.msra.mxu0 0.0
    %264 = vmatpush.xpose.msra.mxu0 0.0
    %265 = vmatpush.xpose.msra.mxu0 0.0
    %266 = vmatpush.xpose.msra.mxu0 0.0
    %267 = vmatpush.xpose.msra.mxu0 0.0
    %268 = vmatpush.xpose.msra.mxu0 0.0
    %269 = vmatpush.xpose.msra.mxu0 0.0
    %270 = vmatpush.xpose.msra.mxu0 0.0
    %271 = vmatpush.xpose.msra.mxu0 0.0
    %272 = vmatpush.xpose.msra.mxu0 0.0
    %273 = vmatpush.xpose.msra.mxu0 0.0
    %274 = vmatpush.xpose.msra.mxu0 0.0
    %275 = vmatpush.xpose.msra.mxu0 0.0
    %276 = vmatpush.xpose.msra.mxu0 0.0
    %277 = vmatpush.xpose.msra.mxu0 0.0
    %278 = vmatpush.xpose.msra.mxu0 %v261
    %279 = vmatmul.f32.gmra.mxu0 %v259
    %v280 = vpop.f32.mrf.mxu0
    %v281 = vadd.f32 0.0, %v280
    %282 = vdwg.mxu0
    %283 = vrot.lane.b32.xlu0 %v162, 96
    %v284 = vpop.permute.xlu0 %283
    %v285 = vsel %vm180, %v162, 0
    %v287 = vsel %vm180, %v284, 0
    %289 = vmatpush.xpose.msra.mxu0 0.0
    %290 = vmatpush.xpose.msra.mxu0 0.0
    %291 = vmatpush.xpose.msra.mxu0 0.0
    %292 = vmatpush.xpose.msra.mxu0 0.0
    %293 = vmatpush.xpose.msra.mxu0 0.0
    %294 = vmatpush.xpose.msra.mxu0 0.0
    %295 = vmatpush.xpose.msra.mxu0 0.0
    %296 = vmatpush.xpose.msra.mxu0 0.0
    %297 = vmatpush.xpose.msra.mxu0 0.0
    %298 = vmatpush.xpose.msra.mxu0 0.0
    %299 = vmatpush.xpose.msra.mxu0 0.0
    %300 = vmatpush.xpose.msra.mxu0 0.0
    %301 = vmatpush.xpose.msra.mxu0 0.0
    %302 = vmatpush.xpose.msra.mxu0 0.0
    %303 = vmatpush.xpose.msra.mxu0 0.0
    %304 = vmatpush.xpose.msra.mxu0 %v287
    %305 = vmatmul.f32.gmra.mxu0 %v285
    %v306 = vpop.f32.mrf.mxu0
    %v307 = vadd.f32 0.0, %v306
    %308 = vdwg.mxu0
    %309 = vrot.lane.b32.xlu0 %v173, 96
    %v310 = vpop.permute.xlu0 %309
    %v311 = vsel %vm180, %v173, 0
    %v313 = vsel %vm180, %v310, 0
    %315 = vmatpush.xpose.msra.mxu0 0.0
    %316 = vmatpush.xpose.msra.mxu0 0.0
    %317 = vmatpush.xpose.msra.mxu0 0.0
    %318 = vmatpush.xpose.msra.mxu0 0.0
    %319 = vmatpush.xpose.msra.mxu0 0.0
    %320 = vmatpush.xpose.msra.mxu0 0.0
    %321 = vmatpush.xpose.msra.mxu0 0.0
    %322 = vmatpush.xpose.msra.mxu0 0.0
    %323 = vmatpush.xpose.msra.mxu0 0.0
    %324 = vmatpush.xpose.msra.mxu0 0.0
    %325 = vmatpush.xpose.msra.mxu0 0.0
    %326 = vmatpush.xpose.msra.mxu0 0.0
    %327 = vmatpush.xpose.msra.mxu0 0.0
    %328 = vmatpush.xpose.msra.mxu0 0.0
    %329 = vmatpush.xpose.msra.mxu0 0.0
    %330 = vmatpush.xpose.msra.mxu0 %v313
    %331 = vmatmul.f32.gmra.mxu0 %v311
    %v332 = vpop.f32.mrf.mxu0
    %v333 = vadd.f32 0.0, %v332
    %334 = vdwg.mxu0
    %335 = vrot.lane.b32.xlu0 %v175, 96
    %v336 = vpop.permute.xlu0 %335
    %v337 = vsel %vm180, %v175, 0
    %v339 = vsel %vm180, %v336, 0
    %341 = vmatpush.xpose.msra.mxu0 0.0
    %342 = vmatpush.xpose.msra.mxu0 0.0
    %343 = vmatpush.xpose.msra.mxu0 0.0
    %344 = vmatpush.xpose.msra.mxu0 0.0
    %345 = vmatpush.xpose.msra.mxu0 0.0
    %346 = vmatpush.xpose.msra.mxu0 0.0
    %347 = vmatpush.xpose.msra.mxu0 0.0
    %348 = vmatpush.xpose.msra.mxu0 0.0
    %349 = vmatpush.xpose.msra.mxu0 0.0
    %350 = vmatpush.xpose.msra.mxu0 0.0
    %351 = vmatpush.xpose.msra.mxu0 0.0
    %352 = vmatpush.xpose.msra.mxu0 0.0
    %353 = vmatpush.xpose.msra.mxu0 0.0
    %354 = vmatpush.xpose.msra.mxu0 0.0
    %355 = vmatpush.xpose.msra.mxu0 0.0
    %356 = vmatpush.xpose.msra.mxu0 %v339
    %357 = vmatmul.f32.gmra.mxu0 %v337
    %v358 = vpop.f32.mrf.mxu0
    %v359 = vadd.f32 0.0, %v358
    %360 = vdwg.mxu0
    %361 = vrot.lane.b32.xlu0 %v177, 96
    %v362 = vpop.permute.xlu0 %361
    %v363 = vsel %vm180, %v177, 0
    %v365 = vsel %vm180, %v362, 0
    %367 = vmatpush.xpose.msra.mxu0 0.0
    %368 = vmatpush.xpose.msra.mxu0 0.0
    %369 = vmatpush.xpose.msra.mxu0 0.0
    %370 = vmatpush.xpose.msra.mxu0 0.0
    %371 = vmatpush.xpose.msra.mxu0 0.0
    %372 = vmatpush.xpose.msra.mxu0 0.0
    %373 = vmatpush.xpose.msra.mxu0 0.0
    %374 = vmatpush.xpose.msra.mxu0 0.0
    %375 = vmatpush.xpose.msra.mxu0 0.0
    %376 = vmatpush.xpose.msra.mxu0 0.0
    %377 = vmatpush.xpose.msra.mxu0 0.0
    %378 = vmatpush.xpose.msra.mxu0 0.0
    %379 = vmatpush.xpose.msra.mxu0 0.0
    %380 = vmatpush.xpose.msra.mxu0 0.0
    %381 = vmatpush.xpose.msra.mxu0 0.0
    %382 = vmatpush.xpose.msra.mxu0 %v365
    %383 = vmatmul.f32.gmra.mxu0 %v363
    %v384 = vpop.f32.mrf.mxu0
    %v385 = vadd.f32 0.0, %v384
    %386 = vdwg.mxu0
    %v387 = vmul.f32 %v203, 0.35355338
    %v388 = vmul.f32 %v229, 0.35355338
    %v389 = vmul.f32 %v255, 0.35355338
    %v390 = vmul.f32 %v281, 0.35355338
    %v391 = vmul.f32 %v307, 0.35355338
    %v392 = vmul.f32 %v333, 0.35355338
    %v393 = vmul.f32 %v359, 0.35355338
    %v394 = vmul.f32 %v385, 0.35355338
    %v395 = vsel %vm180, %v387, -inf
    %396 = vmax.xlane.f32.xlu0 %v395
    %v397 = vpop.xlane.xlu0 %396
    %v398 = vsel %vm180, %v388, -inf
    %399 = vmax.xlane.f32.xlu0 %v398
    %v400 = vpop.xlane.xlu0 %399
    %v401 = vsel %vm180, %v389, -inf
    %402 = vmax.xlane.f32.xlu0 %v401
    %v403 = vpop.xlane.xlu0 %402
    %v404 = vsel %vm180, %v390, -inf
    %405 = vmax.xlane.f32.xlu0 %v404
    %v406 = vpop.xlane.xlu0 %405
    %v407 = vsel %vm180, %v391, -inf
    %408 = vmax.xlane.f32.xlu0 %v407
    %v409 = vpop.xlane.xlu0 %408
    %v410 = vsel %vm180, %v392, -inf
    %411 = vmax.xlane.f32.xlu0 %v410
    %v412 = vpop.xlane.xlu0 %411
    %v413 = vsel %vm180, %v393, -inf
    %414 = vmax.xlane.f32.xlu0 %v413
    %v415 = vpop.xlane.xlu0 %414
    %v416 = vsel %vm180, %v394, -inf
    %417 = vmax.xlane.f32.xlu0 %v416
    %v418 = vpop.xlane.xlu0 %417
    %v419 = vsub.f32 %v387, %v397
    %v420 = vsub.f32 %v388, %v400
    %v421 = vsub.f32 %v389, %v403
    %v422 = vsub.f32 %v390, %v406
    %v423 = vsub.f32 %v391, %v409
    %v424 = vsub.f32 %v392, %v412
    %v425 = vsub.f32 %v393, %v415
    %v426 = vsub.f32 %v394, %v418
    %v427 = vmul.f32 %v419, 1.442695
    %v428 = vpow.pop %v427
    %v429 = vmul.f32 %v420, 1.442695
    %v430 = vpow.pop %v429
    %v431 = vmul.f32 %v421, 1.442695
    %v432 = vpow.pop %v431
    %v433 = vmul.f32 %v422, 1.442695
    %v434 = vpow.pop %v433
    %v435 = vmul.f32 %v423, 1.442695
    %v436 = vpow.pop %v435
    %v437 = vmul.f32 %v424, 1.442695
    %v438 = vpow.pop %v437
    %v439 = vmul.f32 %v425, 1.442695
    %v440 = vpow.pop %v439
    %v441 = vmul.f32 %v426, 1.442695
    %v442 = vpow.pop %v441
    %v443 = vsel %vm180, %v428, 0.0
    %444 = vadd.xlane.f32.xlu0 %v443
    %v445 = vpop.xlane.xlu0 %444
    %v446 = vsel %vm180, %v430, 0.0
    %447 = vadd.xlane.f32.xlu0 %v446
    %v448 = vpop.xlane.xlu0 %447
    %v449 = vsel %vm180, %v432, 0.0
    %450 = vadd.xlane.f32.xlu0 %v449
    %v451 = vpop.xlane.xlu0 %450
    %v452 = vsel %vm180, %v434, 0.0
    %453 = vadd.xlane.f32.xlu0 %v452
    %v454 = vpop.xlane.xlu0 %453
    %v455 = vsel %vm180, %v436, 0.0
    %456 = vadd.xlane.f32.xlu0 %v455
    %v457 = vpop.xlane.xlu0 %456
    %v458 = vsel %vm180, %v438, 0.0
    %459 = vadd.xlane.f32.xlu0 %v458
    %v460 = vpop.xlane.xlu0 %459
    %v461 = vsel %vm180, %v440, 0.0
    %462 = vadd.xlane.f32.xlu0 %v461
    %v463 = vpop.xlane.xlu0 %462
    %v464 = vsel %vm180, %v442, 0.0
    %465 = vadd.xlane.f32.xlu0 %v464
    %v466 = vpop.xlane.xlu0 %465
    %v467 = vrcp.pop %v445
    %v468 = vrcp.pop %v448
    %v469 = vrcp.pop %v451
    %v470 = vrcp.pop %v454
    %v471 = vrcp.pop %v457
    %v472 = vrcp.pop %v460
    %v473 = vrcp.pop %v463
    %v474 = vrcp.pop %v466
    %v475 = vmul.f32 %v428, %v467
    %v476 = vmul.f32 %v430, %v468
    %v477 = vmul.f32 %v432, %v469
    %v478 = vmul.f32 %v434, %v470
    %v479 = vmul.f32 %v436, %v471
    %v480 = vmul.f32 %v438, %v472
    %v481 = vmul.f32 %v440, %v473
    %v482 = vmul.f32 %v442, %v474
    %483 = vrot.lane.b32.xlu0 %v160, 64
    %v484 = vpop.permute.xlu0 %483
    %v487 = vsel %vm180, %v475, 0
    %489 = vmatpush.msra.mxu0 0.0
    %490 = vmatpush.msra.mxu0 0.0
    %491 = vmatpush.msra.mxu0 0.0
    %492 = vmatpush.msra.mxu0 0.0
    %493 = vmatpush.msra.mxu0 0.0
    %494 = vmatpush.msra.mxu0 0.0
    %495 = vmatpush.msra.mxu0 0.0
    %496 = vmatpush.msra.mxu0 0.0
    %497 = vmatpush.msra.mxu0 0.0
    %498 = vmatpush.msra.mxu0 0.0
    %499 = vmatpush.msra.mxu0 0.0
    %500 = vmatpush.msra.mxu0 0.0
    %501 = vmatpush.msra.mxu0 0.0
    %502 = vmatpush.msra.mxu0 0.0
    %503 = vmatpush.msra.mxu0 0.0
    %504 = vmatpush.msra.mxu0 %v484
    %505 = vmatmul.f32.gmra.mxu0 %v487
    %v506 = vpop.f32.mrf.mxu0
    %v507 = vadd.f32 0.0, %v506
    %508 = vdwg.mxu0
    %509 = vrot.lane.b32.xlu0 %v166, 64
    %v510 = vpop.permute.xlu0 %509
    %v513 = vsel %vm180, %v476, 0
    %515 = vmatpush.msra.mxu0 0.0
    %516 = vmatpush.msra.mxu0 0.0
    %517 = vmatpush.msra.mxu0 0.0
    %518 = vmatpush.msra.mxu0 0.0
    %519 = vmatpush.msra.mxu0 0.0
    %520 = vmatpush.msra.mxu0 0.0
    %521 = vmatpush.msra.mxu0 0.0
    %522 = vmatpush.msra.mxu0 0.0
    %523 = vmatpush.msra.mxu0 0.0
    %524 = vmatpush.msra.mxu0 0.0
    %525 = vmatpush.msra.mxu0 0.0
    %526 = vmatpush.msra.mxu0 0.0
    %527 = vmatpush.msra.mxu0 0.0
    %528 = vmatpush.msra.mxu0 0.0
    %529 = vmatpush.msra.mxu0 0.0
    %530 = vmatpush.msra.mxu0 %v510
    %531 = vmatmul.f32.gmra.mxu0 %v513
    %v532 = vpop.f32.mrf.mxu0
    %v533 = vadd.f32 0.0, %v532
    %534 = vdwg.mxu0
    %535 = vrot.lane.b32.xlu0 %v168, 64
    %v536 = vpop.permute.xlu0 %535
    %v539 = vsel %vm180, %v477, 0
    %541 = vmatpush.msra.mxu0 0.0
    %542 = vmatpush.msra.mxu0 0.0
    %543 = vmatpush.msra.mxu0 0.0
    %544 = vmatpush.msra.mxu0 0.0
    %545 = vmatpush.msra.mxu0 0.0
    %546 = vmatpush.msra.mxu0 0.0
    %547 = vmatpush.msra.mxu0 0.0
    %548 = vmatpush.msra.mxu0 0.0
    %549 = vmatpush.msra.mxu0 0.0
    %550 = vmatpush.msra.mxu0 0.0
    %551 = vmatpush.msra.mxu0 0.0
    %552 = vmatpush.msra.mxu0 0.0
    %553 = vmatpush.msra.mxu0 0.0
    %554 = vmatpush.msra.mxu0 0.0
    %555 = vmatpush.msra.mxu0 0.0
    %556 = vmatpush.msra.mxu0 %v536
    %557 = vmatmul.f32.gmra.mxu0 %v539
    %v558 = vpop.f32.mrf.mxu0
    %v559 = vadd.f32 0.0, %v558
    %560 = vdwg.mxu0
    %561 = vrot.lane.b32.xlu0 %v170, 64
    %v562 = vpop.permute.xlu0 %561
    %v565 = vsel %vm180, %v478, 0
    %567 = vmatpush.msra.mxu0 0.0
    %568 = vmatpush.msra.mxu0 0.0
    %569 = vmatpush.msra.mxu0 0.0
    %570 = vmatpush.msra.mxu0 0.0
    %571 = vmatpush.msra.mxu0 0.0
    %572 = vmatpush.msra.mxu0 0.0
    %573 = vmatpush.msra.mxu0 0.0
    %574 = vmatpush.msra.mxu0 0.0
    %575 = vmatpush.msra.mxu0 0.0
    %576 = vmatpush.msra.mxu0 0.0
    %577 = vmatpush.msra.mxu0 0.0
    %578 = vmatpush.msra.mxu0 0.0
    %579 = vmatpush.msra.mxu0 0.0
    %580 = vmatpush.msra.mxu0 0.0
    %581 = vmatpush.msra.mxu0 0.0
    %582 = vmatpush.msra.mxu0 %v562
    %583 = vmatmul.f32.gmra.mxu0 %v565
    %v584 = vpop.f32.mrf.mxu0
    %v585 = vadd.f32 0.0, %v584
    %586 = vdwg.mxu0
    %587 = vrot.lane.b32.xlu0 %v162, 64
    %v588 = vpop.permute.xlu0 %587
    %v591 = vsel %vm180, %v479, 0
    %593 = vmatpush.msra.mxu0 0.0
    %594 = vmatpush.msra.mxu0 0.0
    %595 = vmatpush.msra.mxu0 0.0
    %596 = vmatpush.msra.mxu0 0.0
    %597 = vmatpush.msra.mxu0 0.0
    %598 = vmatpush.msra.mxu0 0.0
    %599 = vmatpush.msra.mxu0 0.0
    %600 = vmatpush.msra.mxu0 0.0
    %601 = vmatpush.msra.mxu0 0.0
    %602 = vmatpush.msra.mxu0 0.0
    %603 = vmatpush.msra.mxu0 0.0
    %604 = vmatpush.msra.mxu0 0.0
    %605 = vmatpush.msra.mxu0 0.0
    %606 = vmatpush.msra.mxu0 0.0
    %607 = vmatpush.msra.mxu0 0.0
    %608 = vmatpush.msra.mxu0 %v588
    %609 = vmatmul.f32.gmra.mxu0 %v591
    %v610 = vpop.f32.mrf.mxu0
    %v611 = vadd.f32 0.0, %v610
    %612 = vdwg.mxu0
    %613 = vrot.lane.b32.xlu0 %v173, 64
    %v614 = vpop.permute.xlu0 %613
    %v617 = vsel %vm180, %v480, 0
    %619 = vmatpush.msra.mxu0 0.0
    %620 = vmatpush.msra.mxu0 0.0
    %621 = vmatpush.msra.mxu0 0.0
    %622 = vmatpush.msra.mxu0 0.0
    %623 = vmatpush.msra.mxu0 0.0
    %624 = vmatpush.msra.mxu0 0.0
    %625 = vmatpush.msra.mxu0 0.0
    %626 = vmatpush.msra.mxu0 0.0
    %627 = vmatpush.msra.mxu0 0.0
    %628 = vmatpush.msra.mxu0 0.0
    %629 = vmatpush.msra.mxu0 0.0
    %630 = vmatpush.msra.mxu0 0.0
    %631 = vmatpush.msra.mxu0 0.0
    %632 = vmatpush.msra.mxu0 0.0
    %633 = vmatpush.msra.mxu0 0.0
    %634 = vmatpush.msra.mxu0 %v614
    %635 = vmatmul.f32.gmra.mxu0 %v617
    %v636 = vpop.f32.mrf.mxu0
    %v637 = vadd.f32 0.0, %v636
    %638 = vdwg.mxu0
    %639 = vrot.lane.b32.xlu0 %v175, 64
    %v640 = vpop.permute.xlu0 %639
    %v643 = vsel %vm180, %v481, 0
    %645 = vmatpush.msra.mxu0 0.0
    %646 = vmatpush.msra.mxu0 0.0
    %647 = vmatpush.msra.mxu0 0.0
    %648 = vmatpush.msra.mxu0 0.0
    %649 = vmatpush.msra.mxu0 0.0
    %650 = vmatpush.msra.mxu0 0.0
    %651 = vmatpush.msra.mxu0 0.0
    %652 = vmatpush.msra.mxu0 0.0
    %653 = vmatpush.msra.mxu0 0.0
    %654 = vmatpush.msra.mxu0 0.0
    %655 = vmatpush.msra.mxu0 0.0
    %656 = vmatpush.msra.mxu0 0.0
    %657 = vmatpush.msra.mxu0 0.0
    %658 = vmatpush.msra.mxu0 0.0
    %659 = vmatpush.msra.mxu0 0.0
    %660 = vmatpush.msra.mxu0 %v640
    %661 = vmatmul.f32.gmra.mxu0 %v643
    %v662 = vpop.f32.mrf.mxu0
    %v663 = vadd.f32 0.0, %v662
    %664 = vdwg.mxu0
    %665 = vrot.lane.b32.xlu0 %v177, 64
    %v666 = vpop.permute.xlu0 %665
    %v669 = vsel %vm180, %v482, 0
    %671 = vmatpush.msra.mxu0 0.0
    %672 = vmatpush.msra.mxu0 0.0
    %673 = vmatpush.msra.mxu0 0.0
    %674 = vmatpush.msra.mxu0 0.0
    %675 = vmatpush.msra.mxu0 0.0
    %676 = vmatpush.msra.mxu0 0.0
    %677 = vmatpush.msra.mxu0 0.0
    %678 = vmatpush.msra.mxu0 0.0
    %679 = vmatpush.msra.mxu0 0.0
    %680 = vmatpush.msra.mxu0 0.0
    %681 = vmatpush.msra.mxu0 0.0
    %682 = vmatpush.msra.mxu0 0.0
    %683 = vmatpush.msra.mxu0 0.0
    %684 = vmatpush.msra.mxu0 0.0
    %685 = vmatpush.msra.mxu0 0.0
    %686 = vmatpush.msra.mxu0 %v666
    %687 = vmatmul.f32.gmra.mxu0 %v669
    %v688 = vpop.f32.mrf.mxu0
    %v689 = vadd.f32 0.0, %v688
    %690 = vdwg.mxu0
    %v691 = vpack.c.bf16 %v507, %v507
    %v692 = vpack.c.bf16 %v533, %v533
    %v693 = vpack.c.bf16 %v559, %v559
    %v694 = vpack.c.bf16 %v585, %v585
    %v695 = vpack.c.bf16 %v611, %v611
    %v696 = vpack.c.bf16 %v637, %v637
    %v697 = vpack.c.bf16 %v663, %v663
    %v698 = vpack.c.bf16 %v689, %v689
    %v699 = vld [vmem:[%s5] sm:$0xf]
    %v700 = vld [vmem:[%s5 + $0x4] sm:$0xf]
    %v701 = vld [vmem:[%s5 + $0x8] sm:$0xf]
    %v702 = vld [vmem:[%s5 + $0xc] sm:$0xf]
    %v703 = vld [vmem:[%s5 + $0x10] sm:$0xf]
    %v704 = vld [vmem:[%s5 + $0x14] sm:$0xf]
    %v705 = vld [vmem:[%s5 + $0x18] sm:$0xf]
    %v706 = vld [vmem:[%s5 + $0x1c] sm:$0xf]
    %v708 = vsel %vm180, %v691, 0
    %vm710 = vcmask 1043456
    %v712 = vsel %vm710, %v699, 0
    %714 = vmatpush.bf16.msra.mxu0 0
    %715 = vmatpush.bf16.msra.mxu0 0
    %716 = vmatpush.bf16.msra.mxu0 0
    %717 = vmatpush.bf16.msra.mxu0 0
    %718 = vmatpush.bf16.msra.mxu0 0
    %719 = vmatpush.bf16.msra.mxu0 0
    %720 = vmatpush.bf16.msra.mxu0 0
    %721 = vmatpush.bf16.msra.mxu0 %v712
    %722 = vmatmul.bf16.gmra.mxu0 %v708
    %v723 = vpop.f32.mrf.mxu0
    %v724 = vadd.f32 0.0, %v723
    %v725 = vpop.f32.mrf.mxu0
    %726 = vdwg.mxu0
    %v728 = vsel %vm180, %v692, 0
    %v731 = vsel %vm710, %v700, 0
    %733 = vmatpush.bf16.msra.mxu0 0
    %734 = vmatpush.bf16.msra.mxu0 0
    %735 = vmatpush.bf16.msra.mxu0 0
    %736 = vmatpush.bf16.msra.mxu0 0
    %737 = vmatpush.bf16.msra.mxu0 0
    %738 = vmatpush.bf16.msra.mxu0 0
    %739 = vmatpush.bf16.msra.mxu0 0
    %740 = vmatpush.bf16.msra.mxu0 %v731
    %741 = vmatmul.bf16.gmra.mxu0 %v728
    %v742 = vpop.f32.mrf.mxu0
    %v743 = vadd.f32 0.0, %v742
    %v744 = vpop.f32.mrf.mxu0
    %745 = vdwg.mxu0
    %v747 = vsel %vm180, %v693, 0
    %v750 = vsel %vm710, %v701, 0
    %752 = vmatpush.bf16.msra.mxu0 0
    %753 = vmatpush.bf16.msra.mxu0 0
    %754 = vmatpush.bf16.msra.mxu0 0
    %755 = vmatpush.bf16.msra.mxu0 0
    %756 = vmatpush.bf16.msra.mxu0 0
    %757 = vmatpush.bf16.msra.mxu0 0
    %758 = vmatpush.bf16.msra.mxu0 0
    %759 = vmatpush.bf16.msra.mxu0 %v750
    %760 = vmatmul.bf16.gmra.mxu0 %v747
    %v761 = vpop.f32.mrf.mxu0
    %v762 = vadd.f32 0.0, %v761
    %v763 = vpop.f32.mrf.mxu0
    %764 = vdwg.mxu0
    %v766 = vsel %vm180, %v694, 0
    %v769 = vsel %vm710, %v702, 0
    %771 = vmatpush.bf16.msra.mxu0 0
    %772 = vmatpush.bf16.msra.mxu0 0
    %773 = vmatpush.bf16.msra.mxu0 0
    %774 = vmatpush.bf16.msra.mxu0 0
    %775 = vmatpush.bf16.msra.mxu0 0
    %776 = vmatpush.bf16.msra.mxu0 0
    %777 = vmatpush.bf16.msra.mxu0 0
    %778 = vmatpush.bf16.msra.mxu0 %v769
    %779 = vmatmul.bf16.gmra.mxu0 %v766
    %v780 = vpop.f32.mrf.mxu0
    %v781 = vadd.f32 0.0, %v780
    %v782 = vpop.f32.mrf.mxu0
    %783 = vdwg.mxu0
    %v785 = vsel %vm180, %v695, 0
    %v788 = vsel %vm710, %v703, 0
    %790 = vmatpush.bf16.msra.mxu0 0
    %791 = vmatpush.bf16.msra.mxu0 0
    %792 = vmatpush.bf16.msra.mxu0 0
    %793 = vmatpush.bf16.msra.mxu0 0
    %794 = vmatpush.bf16.msra.mxu0 0
    %795 = vmatpush.bf16.msra.mxu0 0
    %796 = vmatpush.bf16.msra.mxu0 0
    %797 = vmatpush.bf16.msra.mxu0 %v788
    %798 = vmatmul.bf16.gmra.mxu0 %v785
    %v799 = vpop.f32.mrf.mxu0
    %v800 = vadd.f32 0.0, %v799
    %v801 = vpop.f32.mrf.mxu0
    %802 = vdwg.mxu0
    %v804 = vsel %vm180, %v696, 0
    %v807 = vsel %vm710, %v704, 0
    %809 = vmatpush.bf16.msra.mxu0 0
    %810 = vmatpush.bf16.msra.mxu0 0
    %811 = vmatpush.bf16.msra.mxu0 0
    %812 = vmatpush.bf16.msra.mxu0 0
    %813 = vmatpush.bf16.msra.mxu0 0
    %814 = vmatpush.bf16.msra.mxu0 0
    %815 = vmatpush.bf16.msra.mxu0 0
    %816 = vmatpush.bf16.msra.mxu0 %v807
    %817 = vmatmul.bf16.gmra.mxu0 %v804
    %v818 = vpop.f32.mrf.mxu0
    %v819 = vadd.f32 0.0, %v818
    %v820 = vpop.f32.mrf.mxu0
    %821 = vdwg.mxu0
    %v823 = vsel %vm180, %v697, 0
    %v826 = vsel %vm710, %v705, 0
    %828 = vmatpush.bf16.msra.mxu0 0
    %829 = vmatpush.bf16.msra.mxu0 0
    %830 = vmatpush.bf16.msra.mxu0 0
    %831 = vmatpush.bf16.msra.mxu0 0
    %832 = vmatpush.bf16.msra.mxu0 0
    %833 = vmatpush.bf16.msra.mxu0 0
    %834 = vmatpush.bf16.msra.mxu0 0
    %835 = vmatpush.bf16.msra.mxu0 %v826
    %836 = vmatmul.bf16.gmra.mxu0 %v823
    %v837 = vpop.f32.mrf.mxu0
    %v838 = vadd.f32 0.0, %v837
    %v839 = vpop.f32.mrf.mxu0
    %840 = vdwg.mxu0
    %v842 = vsel %vm180, %v698, 0
    %v845 = vsel %vm710, %v706, 0
    %847 = vmatpush.bf16.msra.mxu0 0
    %848 = vmatpush.bf16.msra.mxu0 0
    %849 = vmatpush.bf16.msra.mxu0 0
    %850 = vmatpush.bf16.msra.mxu0 0
    %851 = vmatpush.bf16.msra.mxu0 0
    %852 = vmatpush.bf16.msra.mxu0 0
    %853 = vmatpush.bf16.msra.mxu0 0
    %854 = vmatpush.bf16.msra.mxu0 %v845
    %855 = vmatmul.bf16.gmra.mxu0 %v842
    %v856 = vpop.f32.mrf.mxu0
    %v857 = vadd.f32 0.0, %v856
    %v858 = vpop.f32.mrf.mxu0
    %859 = vdwg.mxu0
    %v860 = vsel %vm64, %v724, 0.0
    %v861 = vsel %vm64, %v743, 0.0
    %v862 = vadd.f32 %v860, %v861
    %v863 = vsel %vm64, %v762, 0.0
    %v864 = vadd.f32 %v862, %v863
    %v865 = vsel %vm64, %v781, 0.0
    %v866 = vadd.f32 %v864, %v865
    %v867 = vsel %vm64, %v800, 0.0
    %v868 = vsel %vm64, %v819, 0.0
    %v869 = vadd.f32 %v867, %v868
    %v870 = vsel %vm64, %v838, 0.0
    %v871 = vadd.f32 %v869, %v870
    %v872 = vsel %vm64, %v857, 0.0
    %v873 = vadd.f32 %v871, %v872
    %v874 = vadd.f32 %v60, %v866
    %v875 = vadd.f32 %v61, %v873
    %v876 = vld [vmem:[%s6] sm:$0x1]
    %v878 = vperm.slane %v876, 0
    %v880 = vadd.f32 %v874, %v878
    %v881 = vadd.f32 %v875, %v878
    %v882 = vld [vmem:[%s7] sm:$0x1]
    %v883 = vld [vmem:[%s8] sm:$0x1]
    %v884 = vsel %vm64, %v880, 0.0
    %885 = vadd.xlane.f32.xlu0 %v884
    %v886 = vpop.xlane.xlu0 %885
    %v887 = vsel %vm64, %v881, 0.0
    %888 = vadd.xlane.f32.xlu0 %v887
    %v889 = vpop.xlane.xlu0 %888
    %v890 = vmul.f32 %v886, %v77
    %v891 = vmul.f32 %v889, %v77
    %v892 = vsub.f32 %v880, %v890
    %v893 = vsub.f32 %v881, %v891
    %v894 = vmul.f32 %v892, %v892
    %v895 = vmul.f32 %v893, %v893
    %v896 = vsel %vm64, %v894, 0.0
    %897 = vadd.xlane.f32.xlu0 %v896
    %v898 = vpop.xlane.xlu0 %897
    %v899 = vsel %vm64, %v895, 0.0
    %900 = vadd.xlane.f32.xlu0 %v899
    %v901 = vpop.xlane.xlu0 %900
    %v902 = vmul.f32 %v898, %v77
    %v903 = vmul.f32 %v901, %v77
    %v904 = vadd.f32 %v902, 1e-05
    %v905 = vadd.f32 %v903, 1e-05
    %v906 = vrsqrt.pop %v904
    %v907 = vmul.f32 %v906, %v904
    %v908 = vmul.f32 %v907, %v906
    %v909 = vmul.f32 0.5, %v908
    %v910 = vsub.f32 1.5, %v909
    %v911 = vmul.f32 %v906, %v910
    %vm912 = vweird.f32 %v904
    %vm913 = vweird.f32 %v906
    %vm914 = vmor %vm912, %vm913
    %v915 = vsel %vm914, %v906, %v911
    %v916 = vrsqrt.pop %v905
    %v917 = vmul.f32 %v916, %v905
    %v918 = vmul.f32 %v917, %v916
    %v919 = vmul.f32 0.5, %v918
    %v920 = vsub.f32 1.5, %v919
    %v921 = vmul.f32 %v916, %v920
    %vm922 = vweird.f32 %v905
    %vm923 = vweird.f32 %v916
    %vm924 = vmor %vm922, %vm923
    %v925 = vsel %vm924, %v916, %v921
    %v926 = vmul.f32 %v892, %v915
    %v927 = vmul.f32 %v893, %v925
    %v929 = vperm.slane %v882, 0
    %v931 = vmul.f32 %v926, %v929
    %v932 = vmul.f32 %v927, %v929
    %v934 = vperm.slane %v883, 0
    %v936 = vadd.f32 %v931, %v934
    %v937 = vadd.f32 %v932, %v934
    %v938 = vpack.c.bf16 %v937, %v936
    %v939 = vld [vmem:[%s9] sm:$0xf]
    %v940 = vld [vmem:[%s9 + $0x4] sm:$0xf]
    %v941 = vld [vmem:[%s9 + $0x8] sm:$0xf]
    %v942 = vld [vmem:[%s9 + $0xc] sm:$0xf]
    %v943 = vld [vmem:[%s10] sm:$0x1]
    %v945 = vperm.slane %v943, 0
    %v951 = vunpack.c.l.b16 %v939
    %v952 = vunpack.c.l.b16 %v940
    %v953 = vunpack.c.l.b16 %v941
    %v954 = vunpack.c.l.b16 %v942
    %v955 = vpack.c.b16 %v952, %v951
    %v956 = vpack.c.b16 %v954, %v953
    %v960 = vsel %vm64, %v938, 0
    %962 = vmatpush.bf16.msra.mxu0 0
    %963 = vmatpush.bf16.msra.mxu0 0
    %964 = vmatpush.bf16.msra.mxu0 0
    %965 = vmatpush.bf16.msra.mxu0 0
    %966 = vmatpush.bf16.msra.mxu0 0
    %967 = vmatpush.bf16.msra.mxu0 0
    %968 = vmatpush.bf16.msra.mxu0 %v956
    %969 = vmatpush.bf16.msra.mxu0 %v955
    %970 = vmatmul.bf16.gmra.mxu0 %v960
    %v971 = vpop.f32.mrf.mxu0
    %v972 = vadd.f32 %v945, %v971
    %v973 = vpop.f32.mrf.mxu0
    %v974 = vadd.f32 %v945, %v973
    %975 = vdwg.mxu0
    %v976 = vmul.f32 %v972, 0.5
    %v977 = vmul.f32 %v974, 0.5
    %v978 = vmul.f32 %v972, 0.044715
    %v979 = vmul.f32 %v974, 0.044715
    %v980 = vmul.f32 %v978, %v972
    %v981 = vmul.f32 %v979, %v974
    %v982 = vmul.f32 %v980, %v972
    %v983 = vmul.f32 %v981, %v974
    %v984 = vadd.f32 %v972, %v982
    %v985 = vadd.f32 %v974, %v983
    %v986 = vmul.f32 %v984, 0.7978846
    %v987 = vmul.f32 %v985, 0.7978846
    %v988 = vtanh.pop %v986
    %v989 = vtanh.pop %v987
    %v990 = vadd.f32 %v988, 1.0
    %v991 = vadd.f32 %v989, 1.0
    %v992 = vmul.f32 %v976, %v990
    %v993 = vmul.f32 %v977, %v991
    %v994 = vpack.c.bf16 %v993, %v992
    %v995 = vld [vmem:[%s11] sm:$0xf]
    %v996 = vld [vmem:[%s11 + $0x4] sm:$0xf]
    %v997 = vld [vmem:[%s11 + $0x8] sm:$0xf]
    %v998 = vld [vmem:[%s11 + $0xc] sm:$0xf]
    %v999 = vld [vmem:[%s11 + $0x10] sm:$0xf]
    %v1000 = vld [vmem:[%s11 + $0x14] sm:$0xf]
    %v1001 = vld [vmem:[%s11 + $0x18] sm:$0xf]
    %v1002 = vld [vmem:[%s11 + $0x1c] sm:$0xf]
    %v1003 = vld [vmem:[%s11 + $0x20] sm:$0xf]
    %v1004 = vld [vmem:[%s11 + $0x24] sm:$0xf]
    %v1005 = vld [vmem:[%s11 + $0x28] sm:$0xf]
    %v1006 = vld [vmem:[%s11 + $0x2c] sm:$0xf]
    %v1007 = vld [vmem:[%s11 + $0x30] sm:$0xf]
    %v1008 = vld [vmem:[%s11 + $0x34] sm:$0xf]
    %v1009 = vld [vmem:[%s11 + $0x38] sm:$0xf]
    %v1010 = vld [vmem:[%s11 + $0x3c] sm:$0xf]
    %v1011 = vld [vmem:[%s12] sm:$0x1]
    %v1013 = vperm.slane %v1011, 0
    %v1031 = vunpack.c.l.b16 %v995
    %v1032 = vunpack.c.l.b16 %v996
    %v1033 = vunpack.c.l.b16 %v997
    %v1034 = vunpack.c.l.b16 %v998
    %v1035 = vunpack.c.l.b16 %v999
    %v1036 = vunpack.c.l.b16 %v1000
    %v1037 = vunpack.c.l.b16 %v1001
    %v1038 = vunpack.c.l.b16 %v1002
    %v1039 = vunpack.c.l.b16 %v1003
    %v1040 = vunpack.c.l.b16 %v1004
    %v1041 = vunpack.c.l.b16 %v1005
    %v1042 = vunpack.c.l.b16 %v1006
    %v1043 = vunpack.c.l.b16 %v1007
    %v1044 = vunpack.c.l.b16 %v1008
    %v1045 = vunpack.c.l.b16 %v1009
    %v1046 = vunpack.c.l.b16 %v1010
    %v1047 = vpack.c.b16 %v1032, %v1031
    %v1048 = vpack.c.b16 %v1034, %v1033
    %v1049 = vpack.c.b16 %v1036, %v1035
    %v1050 = vpack.c.b16 %v1038, %v1037
    %v1051 = vpack.c.b16 %v1040, %v1039
    %v1052 = vpack.c.b16 %v1042, %v1041
    %v1053 = vpack.c.b16 %v1044, %v1043
    %v1054 = vpack.c.b16 %v1046, %v1045
    %1063 = vmatpush.bf16.msra.mxu0 %v1054
    %1064 = vmatpush.bf16.msra.mxu0 %v1053
    %1065 = vmatpush.bf16.msra.mxu0 %v1052
    %1066 = vmatpush.bf16.msra.mxu0 %v1051
    %1067 = vmatpush.bf16.msra.mxu0 %v1050
    %1068 = vmatpush.bf16.msra.mxu0 %v1049
    %1069 = vmatpush.bf16.msra.mxu0 %v1048
    %1070 = vmatpush.bf16.msra.mxu0 %v1047
    %1071 = vmatmul.bf16.gmra.mxu0 %v994
    %v1072 = vpop.f32.mrf.mxu0
    %v1073 = vadd.f32 %v1013, %v1072
    %v1074 = vpop.f32.mrf.mxu0
    %v1075 = vadd.f32 %v1013, %v1074
    %1076 = vdwg.mxu0
    %v1077 = vadd.f32 %v880, %v1073
    %v1078 = vadd.f32 %v881, %v1075
    %1079 = vst.msk [vmem:[#allocation5] sm:$0xff] %vm64, %v1077
    %1080 = vst.msk [vmem:[#allocation5 + $0x8] sm:$0xff] %vm64, %v1078
    // Predicated region
    $region58: #{tpu_custom_call.1} parent=1 // pred_check
      _
    $region59: #{tpu_custom_call.1} parent=1 // pred_check_branch
      %1082 = sbr.rel (0) target = $region61
    $region60: #{tpu_custom_call.1} parent=1 // pred_region
      %1084 = vsyncadd [#allocation4], 0
      %s1085 = sshll.u32 [#allocation5], 4
      %s1086 = int_to_ptr.vmem [resolvable:$true] %s1085
      %s1087 = sshll.u32 %s13, 4
      %s1088 = int_to_ptr.hbm [resolvable:$true] %s1087
      %1093 = dma.vmem_to_hbm [thread:$0]  %s1086, 256, %s1088, [#allocation4], 128, 128, 8
    $region61: #{tpu_custom_call.1} parent=1 // pred_fallthru
      _
    // Predicated region
    $region62: #{tpu_custom_call.1} parent=1 // pred_check
      _
    $region63: #{tpu_custom_call.1} parent=1 // pred_check_branch
      %1095 = sbr.rel (0) target = $region65
    $region64: #{tpu_custom_call.1} parent=1 // pred_region
      %1097 = dma.done [#allocation4], 256
    $region65: #{tpu_custom_call.1} parent=1 // pred_fallthru
      _
    %1098 = vsyncpa [#allocation3], 1
    %1099 = vsyncpa [#allocation4], 1

</llo_original>
